<compile_context>
chip_gen: v7x
topology: tpu7x:2x2x1
jax: 0.10.0
libtpu: 0.0.40
codegen_flags: <defaults>
</compile_context>

<pallas_src>
import functools

import jax
import jax.numpy as jnp
from jax.experimental import pallas as pl
from jax.experimental.pallas import tpu as pltpu


def maxmil_kernel(x_ref, w1_ref, b1_ref, w2_ref, b2_ref, o_ref, *, valid_in_last):
    # x_ref : (BB, TN, D)  f32   — BB bags x TN instances of the current block
    # w1_ref: (D, H)       bf16    b1_ref: (1, H)  f32
    # w2_ref: (H, Cp)      bf16    b2_ref: (1, Cp) f32   (Cp = C padded to >=128)
    # o_ref : (BB, Cp)     f32   — resident across the instance axis (running max)
    k = pl.program_id(1)
    nk = pl.num_programs(1)

    @pl.when(k == 0)
    def _init():
        o_ref[...] = jnp.full(o_ref.shape, -jnp.inf, dtype=o_ref.dtype)

    bb, tn, d = x_ref.shape
    cp = o_ref.shape[-1]

    # Load f32 tile, cast to bf16 on the VPU, pack (BB, TN, D) -> (BB*TN, D)
    # so one MXU pass sees many rows (TN multiple of 16 keeps the reshape
    # layout-preserving for the packed bf16 tiles).
    x = x_ref[...].astype(jnp.bfloat16).reshape(bb * tn, d)

    # Linear(input_dim, 512) + bias + ReLU  (f32 accumulation / elementwise).
    h = jnp.dot(x, w1_ref[...], preferred_element_type=jnp.float32)
    h = jnp.maximum(h + b1_ref[...], 0.0)                                # (BB*TN, H) f32
    # TODO(synk): nn.Dropout(0.25) is identity at inference; training-mode dropout not implemented.

    # Linear(512, n_classes) WITHOUT bias — b2 is added once at the last step.
    logits = jnp.dot(h.astype(jnp.bfloat16), w2_ref[...],
                     preferred_element_type=jnp.float32)                 # (BB*TN, Cp) f32
    logits = logits.reshape(bb, tn, cp)

    if valid_in_last == tn:
        # No instance padding anywhere: plain running max.
        o_ref[...] = jnp.maximum(o_ref[...], jnp.max(logits, axis=1))
    else:
        @pl.when(k < nk - 1)
        def _full_block():
            o_ref[...] = jnp.maximum(o_ref[...], jnp.max(logits, axis=1))

        @pl.when(k == nk - 1)
        def _last_block():
            # Only the last instance block contains padded rows; mask them with
            # a cheap (TN, 1) iota broadcast into the select.
            row = jax.lax.broadcasted_iota(jnp.int32, (tn, 1), 0).reshape(1, tn, 1)
            masked = jnp.where(row < valid_in_last, logits, -jnp.inf)
            o_ref[...] = jnp.maximum(o_ref[...], jnp.max(masked, axis=1))

    # Hoisted bias: max_n(h@W2 + b2) == max_n(h@W2) + b2 (bit-identical).
    @pl.when(k == nk - 1)
    def _finalize():
        o_ref[...] = o_ref[...] + b2_ref[...]


def _step_vmem_bytes(BB, TN, D, H, Cp, x_itemsize):
    """Rough per-grid-step VMEM footprint (double-buffered blocks + intermediates)."""
    rows = BB * TN
    x_tile = BB * TN * D * x_itemsize * 2            # x block, 2 pipeline buffers
    weights = (D * H + H * Cp) * 2 * 2               # bf16 weights, 2 buffers (worst case)
    biases = (H + Cp) * 4 * 2
    out_blk = BB * Cp * 4 * 2
    inter = rows * H * 4 + rows * H * 2 + rows * Cp * 4   # h f32, h bf16, logits f32
    return x_tile + weights + biases + out_blk + inter


def _choose_bb(B, TN, target_rows):
    bb_fit = max(1, target_rows // TN)
    if B < 16:
        # Tiny batch: keep a single full-extent, naturally aligned bag block.
        return B
    # Guarantee >= 2 blocks on the parallel bag axis (v7x has 2 TensorCores),
    # keep BB a multiple of 8 so the (BB, Cp) output block stays sublane aligned.
    bb_cap = pl.cdiv(pl.cdiv(B, 2), 8) * 8
    bb = min(bb_fit, bb_cap)
    return max(8, (bb // 8) * 8)


def maxmil_forward(x, w1, b1, w2, b2, *, target_rows=2048, max_tn=1024,
                   vmem_limit_bytes=48 * 1024 * 1024):
    """x: (B, N, D) f32; w1: (D, H); b1: (H,); w2: (H, C); b2: (C,). Returns (B, C) f32."""
    B, N, D = x.shape
    H = w1.shape[1]
    C = w2.shape[1]
    x_itemsize = jnp.dtype(x.dtype).itemsize

    # Lane-dense output: pad class dim to a multiple of 128 (min 128, no more).
    Cp = max(128, pl.cdiv(C, 128) * 128)

    # Instance-axis tile: pick the number of blocks first so padding waste is
    # bounded by <16 rows per block, then round the tile to a multiple of 16.
    nk0 = pl.cdiv(N, max_tn)
    TN = min(max_tn, pl.cdiv(pl.cdiv(N, nk0), 16) * 16)
    BB = _choose_bb(B, TN, target_rows)

    # Shrink tiles until the per-step footprint fits under ~75% of the scoped
    # VMEM limit (leaves headroom for compiler scratch / spills).
    vmem_budget = int(vmem_limit_bytes * 0.75)
    while _step_vmem_bytes(BB, TN, D, H, Cp, x_itemsize) > vmem_budget:
        if TN > 16:
            TN = max(16, ((TN // 2) // 16) * 16)
            BB = _choose_bb(B, TN, target_rows)
        elif B >= 16 and BB > 8:
            BB = max(8, ((BB // 2) // 8) * 8)
        else:
            break

    N_pad = pl.cdiv(N, TN) * TN
    B_pad = pl.cdiv(B, BB) * BB
    n_blocks = N_pad // TN
    valid_in_last = N - (n_blocks - 1) * TN   # static: valid rows in the last block

    # Pad whole bags / instance rows only if needed; x stays f32 (cast in kernel).
    x_p = x
    if B_pad != B or N_pad != N:
        x_p = jnp.pad(x, ((0, B_pad - B), (0, N_pad - N), (0, 0)))

    # Weights/biases: small, resident; cast weights to bf16 once.
    w1b = w1.astype(jnp.bfloat16)
    w2b = jnp.pad(w2, ((0, 0), (0, Cp - C))).astype(jnp.bfloat16)
    b1r = b1.reshape(1, H).astype(jnp.float32)
    b2r = jnp.pad(b2.reshape(1, C), ((0, 0), (0, Cp - C))).astype(jnp.float32)

    grid = (B_pad // BB, n_blocks)
    kernel = functools.partial(maxmil_kernel, valid_in_last=valid_in_last)

    flops = 2 * B_pad * N_pad * (D * H + H * Cp)
    bytes_accessed = (B_pad * N_pad * D * x_itemsize
                      + (D * H + H * Cp) * 2 + (H + Cp) * 4
                      + B_pad * Cp * 4)

    out = pl.pallas_call(
        kernel,
        out_shape=jax.ShapeDtypeStruct((B_pad, Cp), jnp.float32),
        grid_spec=pltpu.PrefetchScalarGridSpec(
            num_scalar_prefetch=0,
            grid=grid,
            in_specs=[
                pl.BlockSpec((BB, TN, D), lambda i, k: (i, k, 0)),  # x tile (f32)
                pl.BlockSpec((D, H), lambda i, k: (0, 0)),          # W1 (in, out), resident
                pl.BlockSpec((1, H), lambda i, k: (0, 0)),          # b1
                pl.BlockSpec((H, Cp), lambda i, k: (0, 0)),         # W2 (in, out), resident
                pl.BlockSpec((1, Cp), lambda i, k: (0, 0)),         # b2
            ],
            # Constant over the instance (reduction) axis -> output block is the accumulator.
            out_specs=pl.BlockSpec((BB, Cp), lambda i, k: (i, 0)),
        ),
        compiler_params=pltpu.CompilerParams(
            dimension_semantics=("parallel", "arbitrary"),
            vmem_limit_bytes=vmem_limit_bytes,
        ),
        cost_estimate=pl.CostEstimate(
            flops=flops, transcendentals=0, bytes_accessed=bytes_accessed),
    )(x_p, w1b, b1r, w2b, b2r)

    return out[:B, :C]


def xavier_normal(key, fan_in, fan_out):
    # PyTorch xavier_normal_ on a Linear weight (out, in): std = sqrt(2 / (fan_in + fan_out)).
    std = (2.0 / (fan_in + fan_out)) ** 0.5
    # Stored as (in, out) for the kernel (transpose of the PyTorch layout).
    return std * jax.random.normal(key, (fan_in, fan_out), dtype=jnp.float32)


if __name__ == "__main__":
    # Small MaxMIL-consistent shapes: batch=2 bags, N=16 instances, input_dim=64.
    B, N, D = 2, 16, 64
    HIDDEN = 512
    N_CLASSES = 1

    key = jax.random.PRNGKey(0)
    kx, kw1, kw2 = jax.random.split(key, 3)

    x = jax.random.normal(kx, (B, N, D), dtype=jnp.float32)

    # Deterministic init matching initialize_weights (xavier_normal weights, zero bias).
    w1 = xavier_normal(kw1, D, HIDDEN)                 # (D, 512)
    b1 = jnp.zeros((HIDDEN,), dtype=jnp.float32)
    w2 = xavier_normal(kw2, HIDDEN, N_CLASSES)         # (512, C)
    b2 = jnp.zeros((N_CLASSES,), dtype=jnp.float32)

    out = maxmil_forward(x, w1, b1, w2, b2)
    out = jax.block_until_ready(out)

    # Pure-JAX reference mirroring the kernel numerics (bf16 matmul operands,
    # f32 accumulation, eval-mode dropout == identity).
    xb = x.astype(jnp.bfloat16).astype(jnp.float32)
    w1b = w1.astype(jnp.bfloat16).astype(jnp.float32)
    w2b = w2.astype(jnp.bfloat16).astype(jnp.float32)
    h_ref = jnp.maximum(jnp.einsum("bnd,dh->bnh", xb, w1b) + b1, 0.0)
    h_ref = h_ref.astype(jnp.bfloat16).astype(jnp.float32)
    logits_ref = jnp.einsum("bnh,hc->bnc", h_ref, w2b) + b2
    ref = jnp.max(logits_ref, axis=1)

    assert out.shape == (B, N_CLASSES)
    assert jnp.allclose(out, ref, atol=1e-2, rtol=1e-2), (out, ref)

    print("KERNEL_OK")
</pallas_src>

<mosaic_0001>
module attributes {stable_mosaic.version = 11 : i64} {
  func.func @maxmil_kernel(%arg0: i32, %arg1: i32, %arg2: memref<2x16x64xf32, #tpu.memory_space<vmem>>, %arg3: memref<64x512xbf16, #tpu.memory_space<vmem>>, %arg4: memref<1x512xf32, #tpu.memory_space<vmem>>, %arg5: memref<512x128xbf16, #tpu.memory_space<vmem>>, %arg6: memref<1x128xf32, #tpu.memory_space<vmem>>, %arg7: memref<2x128xf32, #tpu.memory_space<vmem>>) attributes {dimension_semantics = [#tpu.dimension_semantics<parallel>, #tpu.dimension_semantics<arbitrary>], iteration_bounds = array<i64: 1, 1>, scalar_prefetch = 0 : i64, scratch_operands = 0 : i64, tpu.core_type = #tpu.core_type<tc>, window_params = [{transform_indices = @transform_0, window_bounds = array<i64: 2, 16, 64>}, {pipeline_mode = #tpu.pipeline_mode<synchronous>, transform_indices = @transform_1, window_bounds = array<i64: 64, 512>}, {pipeline_mode = #tpu.pipeline_mode<synchronous>, transform_indices = @transform_2, window_bounds = array<i64: 1, 512>}, {pipeline_mode = #tpu.pipeline_mode<synchronous>, transform_indices = @transform_3, window_bounds = array<i64: 512, 128>}, {pipeline_mode = #tpu.pipeline_mode<synchronous>, transform_indices = @transform_4, window_bounds = array<i64: 1, 128>}, {transform_indices = @transform_5, window_bounds = array<i64: 2, 128>}]} {
    %c0_i32 = arith.constant 0 : i32
    %0 = arith.cmpi eq, %arg1, %c0_i32 : i32
    %1 = arith.extui %0 : i1 to i32
    %c0_i32_0 = arith.constant 0 : i32
    %2 = arith.cmpi ne, %1, %c0_i32_0 : i32
    scf.if %2 {
      %cst_18 = arith.constant 0xFF800000 : f32
      %24 = vector.broadcast %cst_18 : f32 to vector<2x128xf32>
      %c0_19 = arith.constant 0 : index
      %c0_20 = arith.constant 0 : index
      %25 = vector.load %arg7[%c0_19, %c0_20] : memref<2x128xf32, #tpu.memory_space<vmem>>, vector<2x128xf32>
      tpu.vector_store %arg7[%c0_19, %c0_20], %24 {strides = array<i32>} : memref<2x128xf32, #tpu.memory_space<vmem>>, vector<2x128xf32>,
    } else {
    }
    %c0 = arith.constant 0 : index
    %c0_1 = arith.constant 0 : index
    %c0_2 = arith.constant 0 : index
    %3 = vector.load %arg2[%c0, %c0_1, %c0_2] : memref<2x16x64xf32, #tpu.memory_space<vmem>>, vector<2x16x64xf32>
    %4 = arith.truncf %3 : vector<2x16x64xf32> to vector<2x16x64xbf16>
    %5 = vector.shape_cast %4 : vector<2x16x64xbf16> to vector<32x64xbf16>
    %c0_3 = arith.constant 0 : index
    %c0_4 = arith.constant 0 : index
    %6 = vector.load %arg3[%c0_3, %c0_4] : memref<64x512xbf16, #tpu.memory_space<vmem>>, vector<64x512xbf16>
    %cst = arith.constant dense<0.000000e+00> : vector<32x512xf32>
    %7 = tpu.matmul %5, %6, %cst {dimension_numbers = #tpu.dot_dimension_numbers<[1], [0], [0], [1], [0, 0, 1, 1], [], []>} : vector<32x64xbf16>, vector<64x512xbf16>, vector<32x512xf32> -> vector<32x512xf32>
    %c0_5 = arith.constant 0 : index
    %c0_6 = arith.constant 0 : index
    %8 = vector.load %arg4[%c0_5, %c0_6] : memref<1x512xf32, #tpu.memory_space<vmem>>, vector<1x512xf32>
    %9 = vector.broadcast %8 : vector<1x512xf32> to vector<32x512xf32>
    %10 = arith.addf %7, %9 : vector<32x512xf32>
    %cst_7 = arith.constant 0.000000e+00 : f32
    %11 = vector.broadcast %cst_7 : f32 to vector<32x512xf32>
    %12 = arith.maximumf %10, %11 : vector<32x512xf32>
    %13 = arith.truncf %12 : vector<32x512xf32> to vector<32x512xbf16>
    %c0_8 = arith.constant 0 : index
    %c0_9 = arith.constant 0 : index
    %14 = vector.load %arg5[%c0_8, %c0_9] : memref<512x128xbf16, #tpu.memory_space<vmem>>, vector<512x128xbf16>
    %cst_10 = arith.constant dense<0.000000e+00> : vector<32x128xf32>
    %15 = tpu.matmul %13, %14, %cst_10 {dimension_numbers = #tpu.dot_dimension_numbers<[1], [0], [0], [1], [0, 0, 1, 1], [], []>} : vector<32x512xbf16>, vector<512x128xbf16>, vector<32x128xf32> -> vector<32x128xf32>
    %16 = vector.shape_cast %15 : vector<32x128xf32> to vector<2x16x128xf32>
    %c0_11 = arith.constant 0 : index
    %c0_12 = arith.constant 0 : index
    %17 = vector.load %arg7[%c0_11, %c0_12] : memref<2x128xf32, #tpu.memory_space<vmem>>, vector<2x128xf32>
    %cst_13 = arith.constant dense<0xFF800000> : vector<2x128xf32>
    %18 = vector.multi_reduction <maximumf>, %16, %cst_13 [1] : vector<2x16x128xf32> to vector<2x128xf32>
    %19 = arith.maximumf %17, %18 : vector<2x128xf32>
    %c0_14 = arith.constant 0 : index
    %c0_15 = arith.constant 0 : index
    %20 = vector.load %arg7[%c0_14, %c0_15] : memref<2x128xf32, #tpu.memory_space<vmem>>, vector<2x128xf32>
    tpu.vector_store %arg7[%c0_14, %c0_15], %19 {strides = array<i32>} : memref<2x128xf32, #tpu.memory_space<vmem>>, vector<2x128xf32>,
    %c0_i32_16 = arith.constant 0 : i32
    %21 = arith.cmpi eq, %arg1, %c0_i32_16 : i32
    %22 = arith.extui %21 : i1 to i32
    %c0_i32_17 = arith.constant 0 : i32
    %23 = arith.cmpi ne, %22, %c0_i32_17 : i32
    scf.if %23 {
      %c0_18 = arith.constant 0 : index
      %c0_19 = arith.constant 0 : index
      %24 = vector.load %arg7[%c0_18, %c0_19] : memref<2x128xf32, #tpu.memory_space<vmem>>, vector<2x128xf32>
      %c0_20 = arith.constant 0 : index
      %c0_21 = arith.constant 0 : index
      %25 = vector.load %arg6[%c0_20, %c0_21] : memref<1x128xf32, #tpu.memory_space<vmem>>, vector<1x128xf32>
      %26 = vector.broadcast %25 : vector<1x128xf32> to vector<2x128xf32>
      %27 = arith.addf %24, %26 : vector<2x128xf32>
      %c0_22 = arith.constant 0 : index
      %c0_23 = arith.constant 0 : index
      %28 = vector.load %arg7[%c0_22, %c0_23] : memref<2x128xf32, #tpu.memory_space<vmem>>, vector<2x128xf32>
      tpu.vector_store %arg7[%c0_22, %c0_23], %27 {strides = array<i32>} : memref<2x128xf32, #tpu.memory_space<vmem>>, vector<2x128xf32>,
    } else {
    }
    return
  }
  func.func @transform_0(%arg0: i32, %arg1: i32) -> (i32, i32, i32) {
    %c0_i32 = arith.constant 0 : i32
    %c0_i32_0 = arith.constant 0 : i32
    return %arg0, %arg1, %c0_i32 : i32, i32, i32
  }
  func.func @transform_1(%arg0: i32, %arg1: i32) -> (i32, i32) {
    %c0_i32 = arith.constant 0 : i32
    %c0_i32_0 = arith.constant 0 : i32
    %c0_i32_1 = arith.constant 0 : i32
    return %c0_i32, %c0_i32_0 : i32, i32
  }
  func.func @transform_2(%arg0: i32, %arg1: i32) -> (i32, i32) {
    %c0_i32 = arith.constant 0 : i32
    %c0_i32_0 = arith.constant 0 : i32
    %c0_i32_1 = arith.constant 0 : i32
    return %c0_i32, %c0_i32_0 : i32, i32
  }
  func.func @transform_3(%arg0: i32, %arg1: i32) -> (i32, i32) {
    %c0_i32 = arith.constant 0 : i32
    %c0_i32_0 = arith.constant 0 : i32
    %c0_i32_1 = arith.constant 0 : i32
    return %c0_i32, %c0_i32_0 : i32, i32
  }
  func.func @transform_4(%arg0: i32, %arg1: i32) -> (i32, i32) {
    %c0_i32 = arith.constant 0 : i32
    %c0_i32_0 = arith.constant 0 : i32
    %c0_i32_1 = arith.constant 0 : i32
    return %c0_i32, %c0_i32_0 : i32, i32
  }
  func.func @transform_5(%arg0: i32, %arg1: i32) -> (i32, i32) {
    %c0_i32 = arith.constant 0 : i32
    %c0_i32_0 = arith.constant 0 : i32
    return %arg0, %c0_i32 : i32, i32
  }
}

</mosaic_0001>

<llo_original>
// kernel: tpu_custom_call.1
$region0: #{tpu_custom_call.1}
  #allocation0 [shape = 'u32[]', space=smem, size = 0x4, offset = 0x4, fixed_abs, tag = 'smem constant byte address 0x4 - core index']
  #allocation1 [shape = 'u32[144,128]{1,0:T(1,128)}', space=vmem, size = 0x12000, scoped, tag = 'internal scratch']
  %s0 = inlined_call_operand.hbm [shape: f32[2,16,64], index: 0, kind: input, shape index: {}]
  %s1 = inlined_call_operand.hbm [shape: bf16[64,512], index: 1, kind: input, shape index: {}]
  %s2 = inlined_call_operand.vmem [shape: f32[1,512], index: 2, kind: input, shape index: {}]
  %s3 = inlined_call_operand.hbm [shape: bf16[512,128], index: 3, kind: input, shape index: {}]
  %s4 = inlined_call_operand.vmem [shape: f32[1,128], index: 4, kind: input, shape index: {}]
  %s5 = inlined_call_operand.hbm [shape: f32[2,128], index: 5, kind: output, shape index: {}]
  %s6 = sld [smem:[#allocation0]]
  $region50: #{tpu_custom_call.1} parent=0
    _
  %s8 = ssub.s32 1, %s6
  %s9 = scalar_select 0, %s8, %s6
  $region1: #{tpu_custom_call.1} parent=0
    #allocation2 [shape = 'u8[16384]{0}', space=vmem, size = 0x4000, scoped, tag = 'input window, operand 0, single buffered']
    #allocation3 [shape = 's32[1]{0}', space=sflag, size = 0x4, scoped, tag = 'scoped memory for tpu_custom_call.1']
    #allocation4 [shape = 's32[1]{0}', space=sflag, size = 0x4, scoped, tag = 'scoped memory for tpu_custom_call.1']
    #allocation5 [shape = 'u8[65536]{0}', space=vmem, size = 0x10000, scoped, tag = 'input window, operand 1, single buffered']
    #allocation6 [shape = 's32[1]{0}', space=sflag, size = 0x4, scoped, tag = 'scoped memory for tpu_custom_call.1']
    #allocation7 [shape = 'u8[131072]{0}', space=vmem, size = 0x20000, scoped, tag = 'input window, operand 3, single buffered']
    #allocation8 [shape = 'u8[1024]{0}', space=vmem, size = 0x400, scoped, tag = 'output window, operand 0, single buffered']
    %10 = vsyncpa [#allocation3], 0
    %11 = vsyncpa [#allocation6], 0
    %12 = vsyncpa [#allocation4], 0
    // Predicated region
    $region2: #{tpu_custom_call.1} parent=1 // pred_check
      _
    $region3: #{tpu_custom_call.1} parent=1 // pred_check_branch
      %14 = sbr.rel (0) target = $region5
    $region4: #{tpu_custom_call.1} parent=1 // pred_region
      %s16 = ssub.s32 512, 512
      %17 = vsyncadd [#allocation3], %s16
      %s18 = sshll.u32 [#allocation2], 4
      %s19 = int_to_ptr.vmem [resolvable:$true] %s18
      %24 = dma.hbm_to_vmem [thread:$0]  %s0, 512, %s19, [#allocation3], 128, 128, 8
    $region5: #{tpu_custom_call.1} parent=1 // pred_fallthru
      _
    // Predicated region
    $region6: #{tpu_custom_call.1} parent=1 // pred_check
      _
    $region7: #{tpu_custom_call.1} parent=1 // pred_check_branch
      %26 = sbr.rel (0) target = $region9
    $region8: #{tpu_custom_call.1} parent=1 // pred_region
      %s28 = ssub.s32 2048, 2048
      %29 = vsyncadd [#allocation6], %s28
      %s30 = sshll.u32 [#allocation5], 4
      %s31 = int_to_ptr.vmem [resolvable:$true] %s30
      %36 = dma.hbm_to_vmem [thread:$0]  %s1, 2048, %s31, [#allocation6], 256, 256, 16
    $region9: #{tpu_custom_call.1} parent=1 // pred_fallthru
      _
    // Predicated region
    $region10: #{tpu_custom_call.1} parent=1 // pred_check
      _
    $region11: #{tpu_custom_call.1} parent=1 // pred_check_branch
      %38 = sbr.rel (0) target = $region13
    $region12: #{tpu_custom_call.1} parent=1 // pred_region
      _
    $region13: #{tpu_custom_call.1} parent=1 // pred_fallthru
      _
    // Predicated region
    $region14: #{tpu_custom_call.1} parent=1 // pred_check
      _
    $region15: #{tpu_custom_call.1} parent=1 // pred_check_branch
      %40 = sbr.rel (0) target = $region17
    $region16: #{tpu_custom_call.1} parent=1 // pred_region
      %s42 = ssub.s32 4096, 4096
      %43 = vsyncadd [#allocation6], %s42
      %s44 = sshll.u32 [#allocation7], 4
      %s45 = int_to_ptr.vmem [resolvable:$true] %s44
      %50 = dma.hbm_to_vmem [thread:$0]  %s3, 4096, %s45, [#allocation6], 64, 64, 4
    $region17: #{tpu_custom_call.1} parent=1 // pred_fallthru
      _
    // Predicated region
    $region18: #{tpu_custom_call.1} parent=1 // pred_check
      _
    $region19: #{tpu_custom_call.1} parent=1 // pred_check_branch
      %52 = sbr.rel (0) target = $region21
    $region20: #{tpu_custom_call.1} parent=1 // pred_region
      _
    $region21: #{tpu_custom_call.1} parent=1 // pred_fallthru
      _
    // Predicated region
    $region22: #{tpu_custom_call.1} parent=1 // pred_check
      _
    $region23: #{tpu_custom_call.1} parent=1 // pred_check_branch
      %54 = sbr.rel (0) target = $region25
    $region24: #{tpu_custom_call.1} parent=1 // pred_region
      %55 = dma.done [#allocation3], 512
    $region25: #{tpu_custom_call.1} parent=1 // pred_fallthru
      _
    // Predicated region
    $region26: #{tpu_custom_call.1} parent=1 // pred_check
      _
    $region27: #{tpu_custom_call.1} parent=1 // pred_check_branch
      %57 = sbr.rel (0) target = $region29
    $region28: #{tpu_custom_call.1} parent=1 // pred_region
      %58 = dma.done [#allocation6], 2048
    $region29: #{tpu_custom_call.1} parent=1 // pred_fallthru
      _
    // Predicated region
    $region30: #{tpu_custom_call.1} parent=1 // pred_check
      _
    $region31: #{tpu_custom_call.1} parent=1 // pred_check_branch
      %60 = sbr.rel (0) target = $region33
    $region32: #{tpu_custom_call.1} parent=1 // pred_region
      %61 = dma.done [#allocation6], 4096
    $region33: #{tpu_custom_call.1} parent=1 // pred_fallthru
      _
    %p63 = scmp.eq.s32.totalorder 0, 0
    // Predicated region
    $region34: #{tpu_custom_call.1} parent=1 // pred_check
      %p64 = pneg %p63
    $region35: #{tpu_custom_call.1} parent=1 // pred_check_branch
      %66 = sbr.rel (%p64) target = $region37
    $region36: #{tpu_custom_call.1} parent=1 // pred_region
      %67 = vst [vmem:[#allocation8] sm:$0x3] -inf
    $region37: #{tpu_custom_call.1} parent=1 // pred_fallthru
      _
    %v68 = vld [vmem:[#allocation2] sm:$0xff]
    %v69 = vld [vmem:[#allocation2 + $0x8] sm:$0xff]
    %v70 = vld [vmem:[#allocation2 + $0x10] sm:$0xff]
    %v71 = vld [vmem:[#allocation2 + $0x18] sm:$0xff]
    %v72 = vpack.c.bf16 %v69, %v68
    %v73 = vpack.c.bf16 %v71, %v70
    %v74 = vld [vmem:[#allocation5] sm:$0xff]
    %v75 = vld [vmem:[#allocation5 + $0x8] sm:$0xff]
    %v76 = vld [vmem:[#allocation5 + $0x10] sm:$0xff]
    %v77 = vld [vmem:[#allocation5 + $0x18] sm:$0xff]
    %v78 = vld [vmem:[#allocation5 + $0x20] sm:$0xff]
    %v79 = vld [vmem:[#allocation5 + $0x28] sm:$0xff]
    %v80 = vld [vmem:[#allocation5 + $0x30] sm:$0xff]
    %v81 = vld [vmem:[#allocation5 + $0x38] sm:$0xff]
    %v82 = vld [vmem:[#allocation5 + $0x40] sm:$0xff]
    %v83 = vld [vmem:[#allocation5 + $0x48] sm:$0xff]
    %v84 = vld [vmem:[#allocation5 + $0x50] sm:$0xff]
    %v85 = vld [vmem:[#allocation5 + $0x58] sm:$0xff]
    %v86 = vld [vmem:[#allocation5 + $0x60] sm:$0xff]
    %v87 = vld [vmem:[#allocation5 + $0x68] sm:$0xff]
    %v88 = vld [vmem:[#allocation5 + $0x70] sm:$0xff]
    %v89 = vld [vmem:[#allocation5 + $0x78] sm:$0xff]
    %v90 = vld [vmem:[%s2] sm:$0xf]
    %v92 = vlaneseq
    %v93 = vshrl.u32 %v92, 7
    %v94 = vsub.s32 0, %v93
    %v95 = vrot.slane %v90, %v94
    %v96 = vlaneseq
    %v97 = vshrl.u32 %v96, 7
    %v98 = vsub.s32 1, %v97
    %v99 = vrot.slane %v90, %v98
    %v100 = vlaneseq
    %v101 = vshrl.u32 %v100, 7
    %v102 = vsub.s32 2, %v101
    %v103 = vrot.slane %v90, %v102
    %v104 = vlaneseq
    %v105 = vshrl.u32 %v104, 7
    %v106 = vsub.s32 3, %v105
    %v107 = vrot.slane %v90, %v106
    %v128 = vunpack.c.l.b16 %v74
    %v129 = vunpack.c.h.b16 %v74
    %v130 = vunpack.c.l.b16 %v75
    %v131 = vunpack.c.h.b16 %v75
    %v132 = vunpack.c.l.b16 %v76
    %v133 = vunpack.c.h.b16 %v76
    %v134 = vunpack.c.l.b16 %v77
    %v135 = vunpack.c.h.b16 %v77
    %v136 = vunpack.c.l.b16 %v78
    %v137 = vunpack.c.h.b16 %v78
    %v138 = vunpack.c.l.b16 %v79
    %v139 = vunpack.c.h.b16 %v79
    %v140 = vunpack.c.l.b16 %v80
    %v141 = vunpack.c.h.b16 %v80
    %v142 = vunpack.c.l.b16 %v81
    %v143 = vunpack.c.h.b16 %v81
    %v144 = vunpack.c.l.b16 %v82
    %v145 = vunpack.c.h.b16 %v82
    %v146 = vunpack.c.l.b16 %v83
    %v147 = vunpack.c.h.b16 %v83
    %v148 = vunpack.c.l.b16 %v84
    %v149 = vunpack.c.h.b16 %v84
    %v150 = vunpack.c.l.b16 %v85
    %v151 = vunpack.c.h.b16 %v85
    %v152 = vunpack.c.l.b16 %v86
    %v153 = vunpack.c.h.b16 %v86
    %v154 = vunpack.c.l.b16 %v87
    %v155 = vunpack.c.h.b16 %v87
    %v156 = vunpack.c.l.b16 %v88
    %v157 = vunpack.c.h.b16 %v88
    %v158 = vunpack.c.l.b16 %v89
    %v159 = vunpack.c.h.b16 %v89
    %v160 = vpack.c.b16 %v132, %v128
    %v161 = vpack.c.b16 %v133, %v129
    %v162 = vpack.c.b16 %v134, %v130
    %v163 = vpack.c.b16 %v135, %v131
    %v164 = vpack.c.b16 %v140, %v136
    %v165 = vpack.c.b16 %v141, %v137
    %v166 = vpack.c.b16 %v142, %v138
    %v167 = vpack.c.b16 %v143, %v139
    %v168 = vpack.c.b16 %v148, %v144
    %v169 = vpack.c.b16 %v149, %v145
    %v170 = vpack.c.b16 %v150, %v146
    %v171 = vpack.c.b16 %v151, %v147
    %v172 = vpack.c.b16 %v156, %v152
    %v173 = vpack.c.b16 %v157, %v153
    %v174 = vpack.c.b16 %v158, %v154
    %v175 = vpack.c.b16 %v159, %v155
    %vm192 = vcmask 523264
    %v194 = vsel %vm192, %v72, 0
    %v197 = vsel %vm192, %v73, 0
    %199 = vmatprep.subr.bf16.mxu0 %v161
    %200 = vmatpush1.bf16.msra.mxu0 %v160
    %201 = vmatprep.subr.bf16.mxu0 %v165
    %202 = vmatpush1.bf16.msra.mxu0 %v164
    %203 = vmatprep.subr.bf16.mxu0 %v169
    %204 = vmatpush1.bf16.msra.mxu0 %v168
    %205 = vmatprep.subr.bf16.mxu0 %v173
    %206 = vmatpush1.bf16.msra.mxu0 %v172
    %207 = vmatprep.subr.bf16.mxu0 0
    %208 = vmatpush1.bf16.msra.mxu0 0
    %209 = vmatprep.subr.bf16.mxu0 0
    %210 = vmatpush1.bf16.msra.mxu0 0
    %211 = vmatprep.subr.bf16.mxu0 0
    %212 = vmatpush1.bf16.msra.mxu0 0
    %213 = vmatprep.subr.bf16.mxu0 0
    %214 = vmatpush1.bf16.msra.mxu0 0
    %215 = vmatprep.subr.bf16.mxu0 0
    %216 = vmatpush1.bf16.msra.mxu0 0
    %217 = vmatprep.subr.bf16.mxu0 0
    %218 = vmatpush1.bf16.msra.mxu0 0
    %219 = vmatprep.subr.bf16.mxu0 0
    %220 = vmatpush1.bf16.msra.mxu0 0
    %221 = vmatprep.subr.bf16.mxu0 0
    %222 = vmatpush1.bf16.msra.mxu0 0
    %223 = vmatprep.subr.bf16.mxu0 0
    %224 = vmatpush1.bf16.msra.mxu0 0
    %225 = vmatprep.subr.bf16.mxu0 0
    %226 = vmatpush1.bf16.msra.mxu0 0
    %227 = vmatprep.subr.bf16.mxu0 0
    %228 = vmatpush1.bf16.msra.mxu0 0
    %229 = vmatprep.subr.bf16.mxu0 0
    %230 = vmatpush1.bf16.msra.mxu0 0
    %231 = vmatprep.mubr.bf16.mxu0 0
    %232 = vmatmul.mubr.bf16.gmra.mrb[0].mxu0 %v194
    %v233 = vpop.f32.mrb[0].mxu0
    %v234 = vadd.f32 %v95, %v233
    %v235 = vpop.f32.mrb[0].mxu0
    %v236 = vadd.f32 %v99, %v235
    %v237 = vpop.f32.mrb[0].mxu0
    %v238 = vadd.f32 %v95, %v237
    %v239 = vpop.f32.mrb[0].mxu0
    %v240 = vadd.f32 %v99, %v239
    %241 = vmatprep.mubr.bf16.mxu0 0
    %242 = vmatmul.mubr.bf16.gmra.mrb[0].mxu0 %v197
    %v243 = vpop.f32.mrb[0].mxu0
    %v244 = vadd.f32 %v95, %v243
    %v245 = vpop.f32.mrb[0].mxu0
    %v246 = vadd.f32 %v99, %v245
    %v247 = vpop.f32.mrb[0].mxu0
    %v248 = vadd.f32 %v95, %v247
    %v249 = vpop.f32.mrb[0].mxu0
    %v250 = vadd.f32 %v99, %v249
    %251 = vdwg.mxu0
    %252 = vmatprep.subr.bf16.mxu0 %v163
    %253 = vmatpush1.bf16.msra.mxu0 %v162
    %254 = vmatprep.subr.bf16.mxu0 %v167
    %255 = vmatpush1.bf16.msra.mxu0 %v166
    %256 = vmatprep.subr.bf16.mxu0 %v171
    %257 = vmatpush1.bf16.msra.mxu0 %v170
    %258 = vmatprep.subr.bf16.mxu0 %v175
    %259 = vmatpush1.bf16.msra.mxu0 %v174
    %260 = vmatprep.subr.bf16.mxu0 0
    %261 = vmatpush1.bf16.msra.mxu0 0
    %262 = vmatprep.subr.bf16.mxu0 0
    %263 = vmatpush1.bf16.msra.mxu0 0
    %264 = vmatprep.subr.bf16.mxu0 0
    %265 = vmatpush1.bf16.msra.mxu0 0
    %266 = vmatprep.subr.bf16.mxu0 0
    %267 = vmatpush1.bf16.msra.mxu0 0
    %268 = vmatprep.subr.bf16.mxu0 0
    %269 = vmatpush1.bf16.msra.mxu0 0
    %270 = vmatprep.subr.bf16.mxu0 0
    %271 = vmatpush1.bf16.msra.mxu0 0
    %272 = vmatprep.subr.bf16.mxu0 0
    %273 = vmatpush1.bf16.msra.mxu0 0
    %274 = vmatprep.subr.bf16.mxu0 0
    %275 = vmatpush1.bf16.msra.mxu0 0
    %276 = vmatprep.subr.bf16.mxu0 0
    %277 = vmatpush1.bf16.msra.mxu0 0
    %278 = vmatprep.subr.bf16.mxu0 0
    %279 = vmatpush1.bf16.msra.mxu0 0
    %280 = vmatprep.subr.bf16.mxu0 0
    %281 = vmatpush1.bf16.msra.mxu0 0
    %282 = vmatprep.subr.bf16.mxu0 0
    %283 = vmatpush1.bf16.msra.mxu0 0
    %284 = vmatprep.mubr.bf16.mxu0 0
    %285 = vmatmul.mubr.bf16.gmra.mrb[0].mxu0 %v194
    %v286 = vpop.f32.mrb[0].mxu0
    %v287 = vadd.f32 %v103, %v286
    %v288 = vpop.f32.mrb[0].mxu0
    %v289 = vadd.f32 %v107, %v288
    %v290 = vpop.f32.mrb[0].mxu0
    %v291 = vadd.f32 %v103, %v290
    %v292 = vpop.f32.mrb[0].mxu0
    %v293 = vadd.f32 %v107, %v292
    %294 = vmatprep.mubr.bf16.mxu0 0
    %295 = vmatmul.mubr.bf16.gmra.mrb[0].mxu0 %v197
    %v296 = vpop.f32.mrb[0].mxu0
    %v297 = vadd.f32 %v103, %v296
    %v298 = vpop.f32.mrb[0].mxu0
    %v299 = vadd.f32 %v107, %v298
    %v300 = vpop.f32.mrb[0].mxu0
    %v301 = vadd.f32 %v103, %v300
    %v302 = vpop.f32.mrb[0].mxu0
    %v303 = vadd.f32 %v107, %v302
    %304 = vdwg.mxu0
    %v305 = vmax.f32 %v234, 0.0
    %v306 = vmax.f32 %v236, 0.0
    %v307 = vmax.f32 %v287, 0.0
    %v308 = vmax.f32 %v289, 0.0
    %v309 = vmax.f32 %v238, 0.0
    %v310 = vmax.f32 %v240, 0.0
    %v311 = vmax.f32 %v291, 0.0
    %v312 = vmax.f32 %v293, 0.0
    %v313 = vmax.f32 %v244, 0.0
    %v314 = vmax.f32 %v246, 0.0
    %v315 = vmax.f32 %v297, 0.0
    %v316 = vmax.f32 %v299, 0.0
    %v317 = vmax.f32 %v248, 0.0
    %v318 = vmax.f32 %v250, 0.0
    %v319 = vmax.f32 %v301, 0.0
    %v320 = vmax.f32 %v303, 0.0
    %v321 = vpack.c.bf16 %v309, %v305
    %v322 = vpack.c.bf16 %v310, %v306
    %v323 = vpack.c.bf16 %v311, %v307
    %v324 = vpack.c.bf16 %v312, %v308
    %v325 = vpack.c.bf16 %v317, %v313
    %v326 = vpack.c.bf16 %v318, %v314
    %v327 = vpack.c.bf16 %v319, %v315
    %v328 = vpack.c.bf16 %v320, %v316
    %v329 = vld [vmem:[#allocation7] sm:$0xf]
    %v330 = vld [vmem:[#allocation7 + $0x4] sm:$0xf]
    %v331 = vld [vmem:[#allocation7 + $0x8] sm:$0xf]
    %v332 = vld [vmem:[#allocation7 + $0xc] sm:$0xf]
    %v333 = vld [vmem:[#allocation7 + $0x10] sm:$0xf]
    %v334 = vld [vmem:[#allocation7 + $0x14] sm:$0xf]
    %v335 = vld [vmem:[#allocation7 + $0x18] sm:$0xf]
    %v336 = vld [vmem:[#allocation7 + $0x1c] sm:$0xf]
    %v337 = vld [vmem:[#allocation7 + $0x20] sm:$0xf]
    %v338 = vld [vmem:[#allocation7 + $0x24] sm:$0xf]
    %v339 = vld [vmem:[#allocation7 + $0x28] sm:$0xf]
    %v340 = vld [vmem:[#allocation7 + $0x2c] sm:$0xf]
    %v341 = vld [vmem:[#allocation7 + $0x30] sm:$0xf]
    %v342 = vld [vmem:[#allocation7 + $0x34] sm:$0xf]
    %v343 = vld [vmem:[#allocation7 + $0x38] sm:$0xf]
    %v344 = vld [vmem:[#allocation7 + $0x3c] sm:$0xf]
    %v345 = vld [vmem:[#allocation7 + $0x40] sm:$0xf]
    %v346 = vld [vmem:[#allocation7 + $0x44] sm:$0xf]
    %v347 = vld [vmem:[#allocation7 + $0x48] sm:$0xf]
    %v348 = vld [vmem:[#allocation7 + $0x4c] sm:$0xf]
    %v349 = vld [vmem:[#allocation7 + $0x50] sm:$0xf]
    %v350 = vld [vmem:[#allocation7 + $0x54] sm:$0xf]
    %v351 = vld [vmem:[#allocation7 + $0x58] sm:$0xf]
    %v352 = vld [vmem:[#allocation7 + $0x5c] sm:$0xf]
    %v353 = vld [vmem:[#allocation7 + $0x60] sm:$0xf]
    %v354 = vld [vmem:[#allocation7 + $0x64] sm:$0xf]
    %v355 = vld [vmem:[#allocation7 + $0x68] sm:$0xf]
    %v356 = vld [vmem:[#allocation7 + $0x6c] sm:$0xf]
    %v357 = vld [vmem:[#allocation7 + $0x70] sm:$0xf]
    %v358 = vld [vmem:[#allocation7 + $0x74] sm:$0xf]
    %v359 = vld [vmem:[#allocation7 + $0x78] sm:$0xf]
    %v360 = vld [vmem:[#allocation7 + $0x7c] sm:$0xf]
    %v361 = vld [vmem:[#allocation7 + $0x80] sm:$0xf]
    %v362 = vld [vmem:[#allocation7 + $0x84] sm:$0xf]
    %v363 = vld [vmem:[#allocation7 + $0x88] sm:$0xf]
    %v364 = vld [vmem:[#allocation7 + $0x8c] sm:$0xf]
    %v365 = vld [vmem:[#allocation7 + $0x90] sm:$0xf]
    %v366 = vld [vmem:[#allocation7 + $0x94] sm:$0xf]
    %v367 = vld [vmem:[#allocation7 + $0x98] sm:$0xf]
    %v368 = vld [vmem:[#allocation7 + $0x9c] sm:$0xf]
    %v369 = vld [vmem:[#allocation7 + $0xa0] sm:$0xf]
    %v370 = vld [vmem:[#allocation7 + $0xa4] sm:$0xf]
    %v371 = vld [vmem:[#allocation7 + $0xa8] sm:$0xf]
    %v372 = vld [vmem:[#allocation7 + $0xac] sm:$0xf]
    %v373 = vld [vmem:[#allocation7 + $0xb0] sm:$0xf]
    %v374 = vld [vmem:[#allocation7 + $0xb4] sm:$0xf]
    %v375 = vld [vmem:[#allocation7 + $0xb8] sm:$0xf]
    %v376 = vld [vmem:[#allocation7 + $0xbc] sm:$0xf]
    %v377 = vld [vmem:[#allocation7 + $0xc0] sm:$0xf]
    %v378 = vld [vmem:[#allocation7 + $0xc4] sm:$0xf]
    %v379 = vld [vmem:[#allocation7 + $0xc8] sm:$0xf]
    %v380 = vld [vmem:[#allocation7 + $0xcc] sm:$0xf]
    %v381 = vld [vmem:[#allocation7 + $0xd0] sm:$0xf]
    %v382 = vld [vmem:[#allocation7 + $0xd4] sm:$0xf]
    %v383 = vld [vmem:[#allocation7 + $0xd8] sm:$0xf]
    %v384 = vld [vmem:[#allocation7 + $0xdc] sm:$0xf]
    %v385 = vld [vmem:[#allocation7 + $0xe0] sm:$0xf]
    %v386 = vld [vmem:[#allocation7 + $0xe4] sm:$0xf]
    %v387 = vld [vmem:[#allocation7 + $0xe8] sm:$0xf]
    %v388 = vld [vmem:[#allocation7 + $0xec] sm:$0xf]
    %v389 = vld [vmem:[#allocation7 + $0xf0] sm:$0xf]
    %v390 = vld [vmem:[#allocation7 + $0xf4] sm:$0xf]
    %v391 = vld [vmem:[#allocation7 + $0xf8] sm:$0xf]
    %v392 = vld [vmem:[#allocation7 + $0xfc] sm:$0xf]
    %v457 = vunpack.c.l.b16 %v329
    %v458 = vunpack.c.l.b16 %v330
    %v459 = vunpack.c.l.b16 %v331
    %v460 = vunpack.c.l.b16 %v332
    %v461 = vunpack.c.l.b16 %v333
    %v462 = vunpack.c.l.b16 %v334
    %v463 = vunpack.c.l.b16 %v335
    %v464 = vunpack.c.l.b16 %v336
    %v465 = vunpack.c.l.b16 %v337
    %v466 = vunpack.c.l.b16 %v338
    %v467 = vunpack.c.l.b16 %v339
    %v468 = vunpack.c.l.b16 %v340
    %v469 = vunpack.c.l.b16 %v341
    %v470 = vunpack.c.l.b16 %v342
    %v471 = vunpack.c.l.b16 %v343
    %v472 = vunpack.c.l.b16 %v344
    %v473 = vunpack.c.l.b16 %v345
    %v474 = vunpack.c.l.b16 %v346
    %v475 = vunpack.c.l.b16 %v347
    %v476 = vunpack.c.l.b16 %v348
    %v477 = vunpack.c.l.b16 %v349
    %v478 = vunpack.c.l.b16 %v350
    %v479 = vunpack.c.l.b16 %v351
    %v480 = vunpack.c.l.b16 %v352
    %v481 = vunpack.c.l.b16 %v353
    %v482 = vunpack.c.l.b16 %v354
    %v483 = vunpack.c.l.b16 %v355
    %v484 = vunpack.c.l.b16 %v356
    %v485 = vunpack.c.l.b16 %v357
    %v486 = vunpack.c.l.b16 %v358
    %v487 = vunpack.c.l.b16 %v359
    %v488 = vunpack.c.l.b16 %v360
    %v489 = vunpack.c.l.b16 %v361
    %v490 = vunpack.c.l.b16 %v362
    %v491 = vunpack.c.l.b16 %v363
    %v492 = vunpack.c.l.b16 %v364
    %v493 = vunpack.c.l.b16 %v365
    %v494 = vunpack.c.l.b16 %v366
    %v495 = vunpack.c.l.b16 %v367
    %v496 = vunpack.c.l.b16 %v368
    %v497 = vunpack.c.l.b16 %v369
    %v498 = vunpack.c.l.b16 %v370
    %v499 = vunpack.c.l.b16 %v371
    %v500 = vunpack.c.l.b16 %v372
    %v501 = vunpack.c.l.b16 %v373
    %v502 = vunpack.c.l.b16 %v374
    %v503 = vunpack.c.l.b16 %v375
    %v504 = vunpack.c.l.b16 %v376
    %v505 = vunpack.c.l.b16 %v377
    %v506 = vunpack.c.l.b16 %v378
    %v507 = vunpack.c.l.b16 %v379
    %v508 = vunpack.c.l.b16 %v380
    %v509 = vunpack.c.l.b16 %v381
    %v510 = vunpack.c.l.b16 %v382
    %v511 = vunpack.c.l.b16 %v383
    %v512 = vunpack.c.l.b16 %v384
    %v513 = vunpack.c.l.b16 %v385
    %v514 = vunpack.c.l.b16 %v386
    %v515 = vunpack.c.l.b16 %v387
    %v516 = vunpack.c.l.b16 %v388
    %v517 = vunpack.c.l.b16 %v389
    %v518 = vunpack.c.l.b16 %v390
    %v519 = vunpack.c.l.b16 %v391
    %v520 = vunpack.c.l.b16 %v392
    %v521 = vpack.c.b16 %v458, %v457
    %v522 = vpack.c.b16 %v460, %v459
    %v523 = vpack.c.b16 %v462, %v461
    %v524 = vpack.c.b16 %v464, %v463
    %v525 = vpack.c.b16 %v466, %v465
    %v526 = vpack.c.b16 %v468, %v467
    %v527 = vpack.c.b16 %v470, %v469
    %v528 = vpack.c.b16 %v472, %v471
    %v529 = vpack.c.b16 %v474, %v473
    %v530 = vpack.c.b16 %v476, %v475
    %v531 = vpack.c.b16 %v478, %v477
    %v532 = vpack.c.b16 %v480, %v479
    %v533 = vpack.c.b16 %v482, %v481
    %v534 = vpack.c.b16 %v484, %v483
    %v535 = vpack.c.b16 %v486, %v485
    %v536 = vpack.c.b16 %v488, %v487
    %v537 = vpack.c.b16 %v490, %v489
    %v538 = vpack.c.b16 %v492, %v491
    %v539 = vpack.c.b16 %v494, %v493
    %v540 = vpack.c.b16 %v496, %v495
    %v541 = vpack.c.b16 %v498, %v497
    %v542 = vpack.c.b16 %v500, %v499
    %v543 = vpack.c.b16 %v502, %v501
    %v544 = vpack.c.b16 %v504, %v503
    %v545 = vpack.c.b16 %v506, %v505
    %v546 = vpack.c.b16 %v508, %v507
    %v547 = vpack.c.b16 %v510, %v509
    %v548 = vpack.c.b16 %v512, %v511
    %v549 = vpack.c.b16 %v514, %v513
    %v550 = vpack.c.b16 %v516, %v515
    %v551 = vpack.c.b16 %v518, %v517
    %v552 = vpack.c.b16 %v520, %v519
    %585 = vmatprep.subr.bf16.mxu0 0
    %586 = vmatpush1.bf16.msra.mxu0 %v521
    %587 = vmatprep.subr.bf16.mxu0 0
    %588 = vmatpush1.bf16.msra.mxu0 %v522
    %589 = vmatprep.subr.bf16.mxu0 0
    %590 = vmatpush1.bf16.msra.mxu0 %v523
    %591 = vmatprep.subr.bf16.mxu0 0
    %592 = vmatpush1.bf16.msra.mxu0 %v524
    %593 = vmatprep.subr.bf16.mxu0 0
    %594 = vmatpush1.bf16.msra.mxu0 %v525
    %595 = vmatprep.subr.bf16.mxu0 0
    %596 = vmatpush1.bf16.msra.mxu0 %v526
    %597 = vmatprep.subr.bf16.mxu0 0
    %598 = vmatpush1.bf16.msra.mxu0 %v527
    %599 = vmatprep.subr.bf16.mxu0 0
    %600 = vmatpush1.bf16.msra.mxu0 %v528
    %601 = vmatprep.subr.bf16.mxu0 0
    %602 = vmatpush1.bf16.msra.mxu0 %v529
    %603 = vmatprep.subr.bf16.mxu0 0
    %604 = vmatpush1.bf16.msra.mxu0 %v530
    %605 = vmatprep.subr.bf16.mxu0 0
    %606 = vmatpush1.bf16.msra.mxu0 %v531
    %607 = vmatprep.subr.bf16.mxu0 0
    %608 = vmatpush1.bf16.msra.mxu0 %v532
    %609 = vmatprep.subr.bf16.mxu0 0
    %610 = vmatpush1.bf16.msra.mxu0 %v533
    %611 = vmatprep.subr.bf16.mxu0 0
    %612 = vmatpush1.bf16.msra.mxu0 %v534
    %613 = vmatprep.subr.bf16.mxu0 0
    %614 = vmatpush1.bf16.msra.mxu0 %v535
    %615 = vmatprep.subr.bf16.mxu0 0
    %616 = vmatpush1.bf16.msra.mxu0 %v536
    %617 = vmatprep.mubr.bf16.mxu0 %v322
    %618 = vmatmul.mubr.bf16.gmra.mrb[0].mxu0 %v321
    %v619 = vpop.f32.mrb[0].mxu0
    %v620 = vadd.f32 0.0, %v619
    %v621 = vpop.f32.mrb[0].mxu0
    %v622 = vpop.f32.mrb[0].mxu0
    %v623 = vadd.f32 0.0, %v622
    %v624 = vpop.f32.mrb[0].mxu0
    %625 = vmatprep.mubr.bf16.mxu0 %v326
    %626 = vmatmul.mubr.bf16.gmra.mrb[0].mxu0 %v325
    %v627 = vpop.f32.mrb[0].mxu0
    %v628 = vadd.f32 0.0, %v627
    %v629 = vpop.f32.mrb[0].mxu0
    %v630 = vpop.f32.mrb[0].mxu0
    %v631 = vadd.f32 0.0, %v630
    %v632 = vpop.f32.mrb[0].mxu0
    %633 = vdwg.mxu0
    %634 = vmatprep.subr.bf16.mxu0 0
    %635 = vmatpush1.bf16.msra.mxu0 %v537
    %636 = vmatprep.subr.bf16.mxu0 0
    %637 = vmatpush1.bf16.msra.mxu0 %v538
    %638 = vmatprep.subr.bf16.mxu0 0
    %639 = vmatpush1.bf16.msra.mxu0 %v539
    %640 = vmatprep.subr.bf16.mxu0 0
    %641 = vmatpush1.bf16.msra.mxu0 %v540
    %642 = vmatprep.subr.bf16.mxu0 0
    %643 = vmatpush1.bf16.msra.mxu0 %v541
    %644 = vmatprep.subr.bf16.mxu0 0
    %645 = vmatpush1.bf16.msra.mxu0 %v542
    %646 = vmatprep.subr.bf16.mxu0 0
    %647 = vmatpush1.bf16.msra.mxu0 %v543
    %648 = vmatprep.subr.bf16.mxu0 0
    %649 = vmatpush1.bf16.msra.mxu0 %v544
    %650 = vmatprep.subr.bf16.mxu0 0
    %651 = vmatpush1.bf16.msra.mxu0 %v545
    %652 = vmatprep.subr.bf16.mxu0 0
    %653 = vmatpush1.bf16.msra.mxu0 %v546
    %654 = vmatprep.subr.bf16.mxu0 0
    %655 = vmatpush1.bf16.msra.mxu0 %v547
    %656 = vmatprep.subr.bf16.mxu0 0
    %657 = vmatpush1.bf16.msra.mxu0 %v548
    %658 = vmatprep.subr.bf16.mxu0 0
    %659 = vmatpush1.bf16.msra.mxu0 %v549
    %660 = vmatprep.subr.bf16.mxu0 0
    %661 = vmatpush1.bf16.msra.mxu0 %v550
    %662 = vmatprep.subr.bf16.mxu0 0
    %663 = vmatpush1.bf16.msra.mxu0 %v551
    %664 = vmatprep.subr.bf16.mxu0 0
    %665 = vmatpush1.bf16.msra.mxu0 %v552
    %666 = vmatprep.mubr.bf16.mxu0 %v324
    %667 = vmatmul.mubr.bf16.gmra.mrb[0].mxu0 %v323
    %v668 = vpop.f32.mrb[0].mxu0
    %v669 = vadd.f32 %v620, %v668
    %v670 = vpop.f32.mrb[0].mxu0
    %v671 = vpop.f32.mrb[0].mxu0
    %v672 = vadd.f32 %v623, %v671
    %v673 = vpop.f32.mrb[0].mxu0
    %674 = vmatprep.mubr.bf16.mxu0 %v328
    %675 = vmatmul.mubr.bf16.gmra.mrb[0].mxu0 %v327
    %v676 = vpop.f32.mrb[0].mxu0
    %v677 = vadd.f32 %v628, %v676
    %v678 = vpop.f32.mrb[0].mxu0
    %v679 = vpop.f32.mrb[0].mxu0
    %v680 = vadd.f32 %v631, %v679
    %v681 = vpop.f32.mrb[0].mxu0
    %682 = vdwg.mxu0
    %v683 = vld [vmem:[#allocation8] sm:$0x3]
    %v684 = vmax.f32 %v669, %v672
    %v685 = vrot.slane %v684, 4
    %v686 = vmax.f32 %v684, %v685
    %v687 = vrot.slane %v686, 2
    %v688 = vmax.f32 %v686, %v687
    %v689 = vrot.slane %v688, 1
    %v690 = vmax.f32 %v688, %v689
    %v691 = vmax.f32 %v677, %v680
    %v692 = vrot.slane %v691, 4
    %v693 = vmax.f32 %v691, %v692
    %v694 = vrot.slane %v693, 2
    %v695 = vmax.f32 %v693, %v694
    %v696 = vrot.slane %v695, 1
    %v697 = vmax.f32 %v695, %v696
    %vm700 = vcmask 1041409
    %v701 = vsel %vm700, %v697, %v690
    %v703 = vmax.f32 %v683, %v701
    %704 = vst [vmem:[#allocation8] sm:$0x3] %v703
    // Predicated region
    $region38: #{tpu_custom_call.1} parent=1 // pred_check
      %p705 = pneg %p63
    $region39: #{tpu_custom_call.1} parent=1 // pred_check_branch
      %707 = sbr.rel (%p705) target = $region41
    $region40: #{tpu_custom_call.1} parent=1 // pred_region
      %v708 = vld [vmem:[#allocation8] sm:$0x3]
      %v709 = vld [vmem:[%s4] sm:$0x1]
      %v711 = vlaneseq
      %v712 = vshrl.u32 %v711, 7
      %v713 = vsub.s32 0, %v712
      %v714 = vrot.slane %v709, %v713
      %v716 = vadd.f32 %v708, %v714
      %717 = vst [vmem:[#allocation8] sm:$0x3] %v716
    $region41: #{tpu_custom_call.1} parent=1 // pred_fallthru
      _
    // Predicated region
    $region42: #{tpu_custom_call.1} parent=1 // pred_check
      _
    $region43: #{tpu_custom_call.1} parent=1 // pred_check_branch
      %719 = sbr.rel (0) target = $region45
    $region44: #{tpu_custom_call.1} parent=1 // pred_region
      %s721 = ssub.s32 32, 32
      %722 = vsyncadd [#allocation4], %s721
      %s724 = sshll.u32 [#allocation8], 4
      %s725 = int_to_ptr.vmem [resolvable:$true] %s724
      %727 = dma.vmem_to_hbm [thread:$0]  %s725, 32, %s5, [#allocation4]
    $region45: #{tpu_custom_call.1} parent=1 // pred_fallthru
      _
    // Predicated region
    $region46: #{tpu_custom_call.1} parent=1 // pred_check
      _
    $region47: #{tpu_custom_call.1} parent=1 // pred_check_branch
      %729 = sbr.rel (0) target = $region49
    $region48: #{tpu_custom_call.1} parent=1 // pred_region
      %730 = dma.done [#allocation4], 32
    $region49: #{tpu_custom_call.1} parent=1 // pred_fallthru
      _
    %731 = vsyncpa [#allocation3], 1
    %732 = vsyncpa [#allocation6], 1
    %733 = vsyncpa [#allocation4], 1

</llo_original>
